<compile_context>
chip_gen: v5e
topology: v5e:2x2
jax: 0.10.0
libtpu: 0.0.40
codegen_flags: <defaults>
</compile_context>

<pallas_src>
import jax
import jax.numpy as jnp
from jax import lax
from jax.experimental import pallas as pl
from jax.experimental.pallas import tpu as pltpu

SEQ_LEN  = 32           # L (multiple of STRIDE)
STRIDE   = 16           # patch length == stride (fixed to 16 in the wrapper)
N_PATCH  = SEQ_LEN // STRIDE
D_MODEL  = 32
D_MLP    = 64
PRED_LEN = 16
EPS      = 1e-5


def _round_up(a, m):
    return ((a + m - 1) // m) * m


# --------------------------------------------------------------------------- #
# Fused kernel: instance-norm -> patch embed -> transformer block -> head
# --------------------------------------------------------------------------- #
def fused_kernel(x_ref, we_ref, wqkv_ref, wo_ref, w1_ref, w2_ref, wh_ref,
                 vec_ref, o_ref):
    # x_ref: (TB, SEQ_LEN) f32       we_ref:  (STRIDE, D)   bf16
    # wqkv_ref: (D, 3D) bf16         wo_ref:  (D, D)        bf16
    # w1_ref: (D, D_MLP) bf16        w2_ref:  (D_MLP, D)    bf16
    # wh_ref: (P*D, PRED) bf16       vec_ref: (8, D_MLP)    f32 (packed biases/LN)
    # o_ref:  (TB, PRED) f32
    x = x_ref[...]                                        # (TB, L) f32

    # per-series instance norm over time (mask is all ones -> plain stats)
    mean = jnp.mean(x, axis=-1, keepdims=True)            # (TB, 1)
    var = jnp.mean((x - mean) ** 2, axis=-1, keepdims=True)
    std = jnp.sqrt(var + EPS)
    xn = (x - mean) / std

    vec = vec_ref[...]
    b_e   = vec[0:1, :D_MODEL]
    ln1_g = vec[1:2, :D_MODEL]
    ln1_b = vec[2:3, :D_MODEL]
    ln2_g = vec[3:4, :D_MODEL]
    ln2_b = vec[4:5, :D_MODEL]
    b_1   = vec[5:6, :D_MLP]
    b_2   = vec[6:7, :D_MODEL]
    b_h   = vec[7:8, :PRED_LEN]

    we, wqkv, wo = we_ref[...], wqkv_ref[...], wo_ref[...]
    w1, w2, wh = w1_ref[...], w2_ref[...], wh_ref[...]

    def dot(a, b):
        # bf16 MXU inputs, f32 accumulation
        return jnp.dot(a.astype(jnp.bfloat16), b,
                       preferred_element_type=jnp.float32)

    def layernorm(h, g, b):
        mu = jnp.mean(h, axis=-1, keepdims=True)
        v = jnp.mean((h - mu) ** 2, axis=-1, keepdims=True)
        return (h - mu) * lax.rsqrt(v + EPS) * g + b

    # --- patch embedding (mask @ W_e[STRIDE:] folded into b_e host-side) ---
    hs = [dot(xn[:, p * STRIDE:(p + 1) * STRIDE], we) + b_e
          for p in range(N_PATCH)]                        # P x (TB, D)

    # --- pre-LN single-head causal self-attention over the P tokens ---
    qkv = [dot(layernorm(h, ln1_g, ln1_b), wqkv) for h in hs]    # P x (TB, 3D)
    qs = [t[:, :D_MODEL] for t in qkv]
    ks = [t[:, D_MODEL:2 * D_MODEL] for t in qkv]
    vs = [t[:, 2 * D_MODEL:] for t in qkv]

    scale = D_MODEL ** -0.5
    for i in range(N_PATCH):
        # query i attends causally to keys 0..i; scores are (TB, 1) row dots
        s = [jnp.sum(qs[i] * ks[j], axis=-1, keepdims=True) * scale
             for j in range(i + 1)]
        m = s[0]
        for sj in s[1:]:
            m = jnp.maximum(m, sj)
        e = [jnp.exp(sj - m) for sj in s]
        denom = e[0]
        for ej in e[1:]:
            denom = denom + ej
        ctx = e[0] * vs[0]
        for j in range(1, i + 1):
            ctx = ctx + e[j] * vs[j]
        hs[i] = hs[i] + dot(ctx / denom, wo)

    # --- MLP with GPT-2 tanh-approx GELU ---
    for p in range(N_PATCH):
        z = dot(layernorm(hs[p], ln2_g, ln2_b), w1) + b_1
        z = 0.5 * z * (1.0 + jnp.tanh(0.7978845608028654
                                      * (z + 0.044715 * z ** 3)))
        hs[p] = hs[p] + dot(z, w2) + b_2

    # --- head: flatten tokens -> pred_len, then de-normalize ---
    acc = b_h + dot(hs[0], wh[:D_MODEL, :])
    for p in range(1, N_PATCH):
        acc = acc + dot(hs[p], wh[p * D_MODEL:(p + 1) * D_MODEL, :])
    o_ref[...] = acc * std + mean


# --------------------------------------------------------------------------- #
# Wrapper (glue)
# --------------------------------------------------------------------------- #
def init_params(key):
    ks = jax.random.split(key, 8)
    n = lambda k, s: (0.02 * jax.random.normal(k, s)).astype(jnp.float32)
    return {
        "W_e": n(ks[0], (2 * STRIDE, D_MODEL)), "b_e": jnp.zeros((1, D_MODEL), jnp.float32),
        "ln1_g": jnp.ones((1, D_MODEL), jnp.float32), "ln1_b": jnp.zeros((1, D_MODEL), jnp.float32),
        "W_q": n(ks[1], (D_MODEL, D_MODEL)), "W_k": n(ks[2], (D_MODEL, D_MODEL)),
        "W_v": n(ks[3], (D_MODEL, D_MODEL)), "W_o": n(ks[4], (D_MODEL, D_MODEL)),
        "ln2_g": jnp.ones((1, D_MODEL), jnp.float32), "ln2_b": jnp.zeros((1, D_MODEL), jnp.float32),
        "W_1": n(ks[5], (D_MODEL, D_MLP)), "b_1": jnp.zeros((1, D_MLP), jnp.float32),
        "W_2": n(ks[6], (D_MLP, D_MODEL)), "b_2": jnp.zeros((1, D_MODEL), jnp.float32),
        "W_h": n(ks[7], (N_PATCH * D_MODEL, PRED_LEN)), "b_h": jnp.zeros((1, PRED_LEN), jnp.float32),
    }


def unitime_baseline_forward(params, past_time, context=None):
    # TODO(synk): text `context` path (GPT-2 tokenizer + pretrained LM) not translatable.
    del context
    B, L = past_time.shape
    assert L == SEQ_LEN

    # batch blocking: fill sublanes / MXU M dimension; pad B up to the block
    TB = 256 if B >= 256 else _round_up(max(B, 1), 8)
    B_pad = _round_up(B, TB)
    x = past_time.astype(jnp.float32)
    if B_pad != B:
        x = jnp.pad(x, ((0, B_pad - B), (0, 0)))

    # host-side weight preprocessing (cheap, done once per call under jit)
    W_e = params["W_e"]
    # mask is all ones -> ones @ W_e[STRIDE:] == column-sum, fold into bias
    b_e_eff = params["b_e"] + jnp.sum(W_e[STRIDE:], axis=0, keepdims=True)
    W_e_x = W_e[:STRIDE].astype(jnp.bfloat16)
    W_qkv = jnp.concatenate(
        [params["W_q"], params["W_k"], params["W_v"]], axis=1).astype(jnp.bfloat16)
    W_o = params["W_o"].astype(jnp.bfloat16)
    W_1 = params["W_1"].astype(jnp.bfloat16)
    W_2 = params["W_2"].astype(jnp.bfloat16)
    W_h = params["W_h"].astype(jnp.bfloat16)

    # pack all tiny vector params into a single (8, D_MLP) f32 array
    def padv(v):
        return jnp.pad(v, ((0, 0), (0, D_MLP - v.shape[1])))
    vec = jnp.concatenate(
        [padv(b_e_eff), padv(params["ln1_g"]), padv(params["ln1_b"]),
         padv(params["ln2_g"]), padv(params["ln2_b"]),
         padv(params["b_1"]), padv(params["b_2"]), padv(params["b_h"])],
        axis=0)                                               # (8, D_MLP)

    wspec = lambda shape: pl.BlockSpec(shape, lambda b: (0, 0))
    grid = (B_pad // TB,)

    out = pl.pallas_call(
        fused_kernel,
        out_shape=jax.ShapeDtypeStruct((B_pad, PRED_LEN), jnp.float32),
        grid_spec=pl.GridSpec(
            grid=grid,
            in_specs=[pl.BlockSpec((TB, SEQ_LEN), lambda b: (b, 0)),
                      wspec((STRIDE, D_MODEL)),
                      wspec((D_MODEL, 3 * D_MODEL)),
                      wspec((D_MODEL, D_MODEL)),
                      wspec((D_MODEL, D_MLP)),
                      wspec((D_MLP, D_MODEL)),
                      wspec((N_PATCH * D_MODEL, PRED_LEN)),
                      wspec((8, D_MLP))],
            out_specs=pl.BlockSpec((TB, PRED_LEN), lambda b: (b, 0))),
        compiler_params=pltpu.CompilerParams(
            dimension_semantics=("parallel",)),
    )(x, W_e_x, W_qkv, W_o, W_1, W_2, W_h, vec)

    # PyTorch wrapper returns base_model(...).squeeze(-1) -> (B, pred_len)
    return out[:B]


if __name__ == "__main__":
    root = jax.random.PRNGKey(0)
    params = init_params(root)
    past_time = jax.random.normal(jax.random.fold_in(root, 123), (2, SEQ_LEN),
                                  dtype=jnp.float32)
    context = "UniTime text context (ignored; see TODO(synk) above)"
    out = unitime_baseline_forward(params, past_time, context)
    out = jax.block_until_ready(out)
    assert out.shape == (2, PRED_LEN) and out.dtype == jnp.float32
    assert bool(jnp.all(jnp.isfinite(out)))
    print("KERNEL_OK")
</pallas_src>

<mosaic_0001>
module attributes {stable_mosaic.version = 11 : i64} {
  func.func @fused_kernel(%arg0: i32, %arg1: memref<8x32xf32, #tpu.memory_space<vmem>>, %arg2: memref<16x32xbf16, #tpu.memory_space<vmem>>, %arg3: memref<32x96xbf16, #tpu.memory_space<vmem>>, %arg4: memref<32x32xbf16, #tpu.memory_space<vmem>>, %arg5: memref<32x64xbf16, #tpu.memory_space<vmem>>, %arg6: memref<64x32xbf16, #tpu.memory_space<vmem>>, %arg7: memref<64x16xbf16, #tpu.memory_space<vmem>>, %arg8: memref<8x64xf32, #tpu.memory_space<vmem>>, %arg9: memref<8x16xf32, #tpu.memory_space<vmem>>) attributes {dimension_semantics = [#tpu.dimension_semantics<parallel>], iteration_bounds = array<i64: 1>, scalar_prefetch = 0 : i64, scratch_operands = 0 : i64, tpu.core_type = #tpu.core_type<tc>, window_params = [{transform_indices = @transform_0, window_bounds = array<i64: 8, 32>}, {pipeline_mode = #tpu.pipeline_mode<synchronous>, transform_indices = @transform_1, window_bounds = array<i64: 16, 32>}, {pipeline_mode = #tpu.pipeline_mode<synchronous>, transform_indices = @transform_2, window_bounds = array<i64: 32, 96>}, {pipeline_mode = #tpu.pipeline_mode<synchronous>, transform_indices = @transform_3, window_bounds = array<i64: 32, 32>}, {pipeline_mode = #tpu.pipeline_mode<synchronous>, transform_indices = @transform_4, window_bounds = array<i64: 32, 64>}, {pipeline_mode = #tpu.pipeline_mode<synchronous>, transform_indices = @transform_5, window_bounds = array<i64: 64, 32>}, {pipeline_mode = #tpu.pipeline_mode<synchronous>, transform_indices = @transform_6, window_bounds = array<i64: 64, 16>}, {pipeline_mode = #tpu.pipeline_mode<synchronous>, transform_indices = @transform_7, window_bounds = array<i64: 8, 64>}, {transform_indices = @transform_8, window_bounds = array<i64: 8, 16>}]} {
    %c0 = arith.constant 0 : index
    %c0_0 = arith.constant 0 : index
    %0 = vector.load %arg1[%c0, %c0_0] : memref<8x32xf32, #tpu.memory_space<vmem>>, vector<8x32xf32>
    %cst = arith.constant dense<0.000000e+00> : vector<8xf32>
    %1 = vector.multi_reduction <add>, %0, %cst [1] : vector<8x32xf32> to vector<8xf32>
    %2 = vector.shape_cast %1 : vector<8xf32> to vector<8x1xf32>
    %cst_1 = arith.constant 3.200000e+01 : f32
    %3 = vector.broadcast %cst_1 : f32 to vector<8x1xf32>
    %4 = arith.divf %2, %3 : vector<8x1xf32>
    %5 = vector.broadcast %4 : vector<8x1xf32> to vector<8x32xf32>
    %6 = arith.subf %0, %5 : vector<8x32xf32>
    %7 = arith.mulf %6, %6 : vector<8x32xf32>
    %cst_2 = arith.constant dense<0.000000e+00> : vector<8xf32>
    %8 = vector.multi_reduction <add>, %7, %cst_2 [1] : vector<8x32xf32> to vector<8xf32>
    %9 = vector.shape_cast %8 : vector<8xf32> to vector<8x1xf32>
    %cst_3 = arith.constant 3.200000e+01 : f32
    %10 = vector.broadcast %cst_3 : f32 to vector<8x1xf32>
    %11 = arith.divf %9, %10 : vector<8x1xf32>
    %cst_4 = arith.constant 9.99999974E-6 : f32
    %12 = vector.broadcast %cst_4 : f32 to vector<8x1xf32>
    %13 = arith.addf %11, %12 : vector<8x1xf32>
    %14 = math.sqrt %13 : vector<8x1xf32>
    %15 = vector.broadcast %4 : vector<8x1xf32> to vector<8x32xf32>
    %16 = arith.subf %0, %15 : vector<8x32xf32>
    %17 = vector.broadcast %14 : vector<8x1xf32> to vector<8x32xf32>
    %18 = arith.divf %16, %17 : vector<8x32xf32>
    %c0_5 = arith.constant 0 : index
    %c0_6 = arith.constant 0 : index
    %19 = vector.load %arg8[%c0_5, %c0_6] : memref<8x64xf32, #tpu.memory_space<vmem>>, vector<8x64xf32>
    %20 = vector.extract_strided_slice %19 {offsets = [0, 0], sizes = [1, 32], strides = [1, 1]} : vector<8x64xf32> to vector<1x32xf32>
    %21 = vector.extract_strided_slice %19 {offsets = [1, 0], sizes = [1, 32], strides = [1, 1]} : vector<8x64xf32> to vector<1x32xf32>
    %22 = vector.extract_strided_slice %19 {offsets = [2, 0], sizes = [1, 32], strides = [1, 1]} : vector<8x64xf32> to vector<1x32xf32>
    %23 = vector.extract_strided_slice %19 {offsets = [3, 0], sizes = [1, 32], strides = [1, 1]} : vector<8x64xf32> to vector<1x32xf32>
    %24 = vector.extract_strided_slice %19 {offsets = [4, 0], sizes = [1, 32], strides = [1, 1]} : vector<8x64xf32> to vector<1x32xf32>
    %25 = vector.extract_strided_slice %19 {offsets = [5, 0], sizes = [1, 64], strides = [1, 1]} : vector<8x64xf32> to vector<1x64xf32>
    %26 = vector.extract_strided_slice %19 {offsets = [6, 0], sizes = [1, 32], strides = [1, 1]} : vector<8x64xf32> to vector<1x32xf32>
    %27 = vector.extract_strided_slice %19 {offsets = [7, 0], sizes = [1, 16], strides = [1, 1]} : vector<8x64xf32> to vector<1x16xf32>
    %c0_7 = arith.constant 0 : index
    %c0_8 = arith.constant 0 : index
    %28 = vector.load %arg2[%c0_7, %c0_8] : memref<16x32xbf16, #tpu.memory_space<vmem>>, vector<16x32xbf16>
    %c0_9 = arith.constant 0 : index
    %c0_10 = arith.constant 0 : index
    %29 = vector.load %arg3[%c0_9, %c0_10] : memref<32x96xbf16, #tpu.memory_space<vmem>>, vector<32x96xbf16>
    %c0_11 = arith.constant 0 : index
    %c0_12 = arith.constant 0 : index
    %30 = vector.load %arg4[%c0_11, %c0_12] : memref<32x32xbf16, #tpu.memory_space<vmem>>, vector<32x32xbf16>
    %c0_13 = arith.constant 0 : index
    %c0_14 = arith.constant 0 : index
    %31 = vector.load %arg5[%c0_13, %c0_14] : memref<32x64xbf16, #tpu.memory_space<vmem>>, vector<32x64xbf16>
    %c0_15 = arith.constant 0 : index
    %c0_16 = arith.constant 0 : index
    %32 = vector.load %arg6[%c0_15, %c0_16] : memref<64x32xbf16, #tpu.memory_space<vmem>>, vector<64x32xbf16>
    %c0_17 = arith.constant 0 : index
    %c0_18 = arith.constant 0 : index
    %33 = vector.load %arg7[%c0_17, %c0_18] : memref<64x16xbf16, #tpu.memory_space<vmem>>, vector<64x16xbf16>
    %34 = vector.extract_strided_slice %18 {offsets = [0, 0], sizes = [8, 16], strides = [1, 1]} : vector<8x32xf32> to vector<8x16xf32>
    %35 = arith.truncf %34 : vector<8x16xf32> to vector<8x16xbf16>
    %cst_19 = arith.constant dense<0.000000e+00> : vector<8x32xf32>
    %36 = tpu.matmul %35, %28, %cst_19 {dimension_numbers = #tpu.dot_dimension_numbers<[1], [0], [0], [1], [0, 0, 1, 1], [], []>} : vector<8x16xbf16>, vector<16x32xbf16>, vector<8x32xf32> -> vector<8x32xf32>
    %37 = vector.broadcast %20 : vector<1x32xf32> to vector<8x32xf32>
    %38 = arith.addf %36, %37 : vector<8x32xf32>
    %39 = vector.extract_strided_slice %18 {offsets = [0, 16], sizes = [8, 16], strides = [1, 1]} : vector<8x32xf32> to vector<8x16xf32>
    %40 = arith.truncf %39 : vector<8x16xf32> to vector<8x16xbf16>
    %cst_20 = arith.constant dense<0.000000e+00> : vector<8x32xf32>
    %41 = tpu.matmul %40, %28, %cst_20 {dimension_numbers = #tpu.dot_dimension_numbers<[1], [0], [0], [1], [0, 0, 1, 1], [], []>} : vector<8x16xbf16>, vector<16x32xbf16>, vector<8x32xf32> -> vector<8x32xf32>
    %42 = vector.broadcast %20 : vector<1x32xf32> to vector<8x32xf32>
    %43 = arith.addf %41, %42 : vector<8x32xf32>
    %cst_21 = arith.constant dense<0.000000e+00> : vector<8xf32>
    %44 = vector.multi_reduction <add>, %38, %cst_21 [1] : vector<8x32xf32> to vector<8xf32>
    %45 = vector.shape_cast %44 : vector<8xf32> to vector<8x1xf32>
    %cst_22 = arith.constant 3.200000e+01 : f32
    %46 = vector.broadcast %cst_22 : f32 to vector<8x1xf32>
    %47 = arith.divf %45, %46 : vector<8x1xf32>
    %48 = vector.broadcast %47 : vector<8x1xf32> to vector<8x32xf32>
    %49 = arith.subf %38, %48 : vector<8x32xf32>
    %50 = arith.mulf %49, %49 : vector<8x32xf32>
    %cst_23 = arith.constant dense<0.000000e+00> : vector<8xf32>
    %51 = vector.multi_reduction <add>, %50, %cst_23 [1] : vector<8x32xf32> to vector<8xf32>
    %52 = vector.shape_cast %51 : vector<8xf32> to vector<8x1xf32>
    %cst_24 = arith.constant 3.200000e+01 : f32
    %53 = vector.broadcast %cst_24 : f32 to vector<8x1xf32>
    %54 = arith.divf %52, %53 : vector<8x1xf32>
    %55 = vector.broadcast %47 : vector<8x1xf32> to vector<8x32xf32>
    %56 = arith.subf %38, %55 : vector<8x32xf32>
    %cst_25 = arith.constant 9.99999974E-6 : f32
    %57 = vector.broadcast %cst_25 : f32 to vector<8x1xf32>
    %58 = arith.addf %54, %57 : vector<8x1xf32>
    %59 = math.rsqrt %58 : vector<8x1xf32>
    %60 = vector.broadcast %59 : vector<8x1xf32> to vector<8x32xf32>
    %61 = arith.mulf %56, %60 : vector<8x32xf32>
    %62 = vector.broadcast %21 : vector<1x32xf32> to vector<8x32xf32>
    %63 = arith.mulf %61, %62 : vector<8x32xf32>
    %64 = vector.broadcast %22 : vector<1x32xf32> to vector<8x32xf32>
    %65 = arith.addf %63, %64 : vector<8x32xf32>
    %66 = arith.truncf %65 : vector<8x32xf32> to vector<8x32xbf16>
    %cst_26 = arith.constant dense<0.000000e+00> : vector<8x96xf32>
    %67 = tpu.matmul %66, %29, %cst_26 {dimension_numbers = #tpu.dot_dimension_numbers<[1], [0], [0], [1], [0, 0, 1, 1], [], []>} : vector<8x32xbf16>, vector<32x96xbf16>, vector<8x96xf32> -> vector<8x96xf32>
    %cst_27 = arith.constant dense<0.000000e+00> : vector<8xf32>
    %68 = vector.multi_reduction <add>, %43, %cst_27 [1] : vector<8x32xf32> to vector<8xf32>
    %69 = vector.shape_cast %68 : vector<8xf32> to vector<8x1xf32>
    %cst_28 = arith.constant 3.200000e+01 : f32
    %70 = vector.broadcast %cst_28 : f32 to vector<8x1xf32>
    %71 = arith.divf %69, %70 : vector<8x1xf32>
    %72 = vector.broadcast %71 : vector<8x1xf32> to vector<8x32xf32>
    %73 = arith.subf %43, %72 : vector<8x32xf32>
    %74 = arith.mulf %73, %73 : vector<8x32xf32>
    %cst_29 = arith.constant dense<0.000000e+00> : vector<8xf32>
    %75 = vector.multi_reduction <add>, %74, %cst_29 [1] : vector<8x32xf32> to vector<8xf32>
    %76 = vector.shape_cast %75 : vector<8xf32> to vector<8x1xf32>
    %cst_30 = arith.constant 3.200000e+01 : f32
    %77 = vector.broadcast %cst_30 : f32 to vector<8x1xf32>
    %78 = arith.divf %76, %77 : vector<8x1xf32>
    %79 = vector.broadcast %71 : vector<8x1xf32> to vector<8x32xf32>
    %80 = arith.subf %43, %79 : vector<8x32xf32>
    %cst_31 = arith.constant 9.99999974E-6 : f32
    %81 = vector.broadcast %cst_31 : f32 to vector<8x1xf32>
    %82 = arith.addf %78, %81 : vector<8x1xf32>
    %83 = math.rsqrt %82 : vector<8x1xf32>
    %84 = vector.broadcast %83 : vector<8x1xf32> to vector<8x32xf32>
    %85 = arith.mulf %80, %84 : vector<8x32xf32>
    %86 = vector.broadcast %21 : vector<1x32xf32> to vector<8x32xf32>
    %87 = arith.mulf %85, %86 : vector<8x32xf32>
    %88 = vector.broadcast %22 : vector<1x32xf32> to vector<8x32xf32>
    %89 = arith.addf %87, %88 : vector<8x32xf32>
    %90 = arith.truncf %89 : vector<8x32xf32> to vector<8x32xbf16>
    %cst_32 = arith.constant dense<0.000000e+00> : vector<8x96xf32>
    %91 = tpu.matmul %90, %29, %cst_32 {dimension_numbers = #tpu.dot_dimension_numbers<[1], [0], [0], [1], [0, 0, 1, 1], [], []>} : vector<8x32xbf16>, vector<32x96xbf16>, vector<8x96xf32> -> vector<8x96xf32>
    %92 = vector.extract_strided_slice %67 {offsets = [0, 0], sizes = [8, 32], strides = [1, 1]} : vector<8x96xf32> to vector<8x32xf32>
    %93 = vector.extract_strided_slice %91 {offsets = [0, 0], sizes = [8, 32], strides = [1, 1]} : vector<8x96xf32> to vector<8x32xf32>
    %94 = vector.extract_strided_slice %67 {offsets = [0, 32], sizes = [8, 32], strides = [1, 1]} : vector<8x96xf32> to vector<8x32xf32>
    %95 = vector.extract_strided_slice %91 {offsets = [0, 32], sizes = [8, 32], strides = [1, 1]} : vector<8x96xf32> to vector<8x32xf32>
    %96 = vector.extract_strided_slice %67 {offsets = [0, 64], sizes = [8, 32], strides = [1, 1]} : vector<8x96xf32> to vector<8x32xf32>
    %97 = vector.extract_strided_slice %91 {offsets = [0, 64], sizes = [8, 32], strides = [1, 1]} : vector<8x96xf32> to vector<8x32xf32>
    %98 = arith.mulf %92, %94 : vector<8x32xf32>
    %cst_33 = arith.constant dense<0.000000e+00> : vector<8xf32>
    %99 = vector.multi_reduction <add>, %98, %cst_33 [1] : vector<8x32xf32> to vector<8xf32>
    %100 = vector.shape_cast %99 : vector<8xf32> to vector<8x1xf32>
    %cst_34 = arith.constant 0.176776692 : f32
    %101 = vector.broadcast %cst_34 : f32 to vector<8x1xf32>
    %102 = arith.mulf %100, %101 : vector<8x1xf32>
    %103 = arith.subf %102, %102 : vector<8x1xf32>
    %104 = math.exp %103 : vector<8x1xf32>
    %105 = vector.broadcast %104 : vector<8x1xf32> to vector<8x32xf32>
    %106 = arith.mulf %105, %96 : vector<8x32xf32>
    %107 = vector.broadcast %104 : vector<8x1xf32> to vector<8x32xf32>
    %108 = arith.divf %106, %107 : vector<8x32xf32>
    %109 = arith.truncf %108 : vector<8x32xf32> to vector<8x32xbf16>
    %cst_35 = arith.constant dense<0.000000e+00> : vector<8x32xf32>
    %110 = tpu.matmul %109, %30, %cst_35 {dimension_numbers = #tpu.dot_dimension_numbers<[1], [0], [0], [1], [0, 0, 1, 1], [], []>} : vector<8x32xbf16>, vector<32x32xbf16>, vector<8x32xf32> -> vector<8x32xf32>
    %111 = arith.addf %38, %110 : vector<8x32xf32>
    %112 = arith.mulf %93, %94 : vector<8x32xf32>
    %cst_36 = arith.constant dense<0.000000e+00> : vector<8xf32>
    %113 = vector.multi_reduction <add>, %112, %cst_36 [1] : vector<8x32xf32> to vector<8xf32>
    %114 = vector.shape_cast %113 : vector<8xf32> to vector<8x1xf32>
    %cst_37 = arith.constant 0.176776692 : f32
    %115 = vector.broadcast %cst_37 : f32 to vector<8x1xf32>
    %116 = arith.mulf %114, %115 : vector<8x1xf32>
    %117 = arith.mulf %93, %95 : vector<8x32xf32>
    %cst_38 = arith.constant dense<0.000000e+00> : vector<8xf32>
    %118 = vector.multi_reduction <add>, %117, %cst_38 [1] : vector<8x32xf32> to vector<8xf32>
    %119 = vector.shape_cast %118 : vector<8xf32> to vector<8x1xf32>
    %cst_39 = arith.constant 0.176776692 : f32
    %120 = vector.broadcast %cst_39 : f32 to vector<8x1xf32>
    %121 = arith.mulf %119, %120 : vector<8x1xf32>
    %122 = arith.maximumf %116, %121 : vector<8x1xf32>
    %123 = arith.subf %116, %122 : vector<8x1xf32>
    %124 = math.exp %123 : vector<8x1xf32>
    %125 = arith.subf %121, %122 : vector<8x1xf32>
    %126 = math.exp %125 : vector<8x1xf32>
    %127 = arith.addf %124, %126 : vector<8x1xf32>
    %128 = vector.broadcast %124 : vector<8x1xf32> to vector<8x32xf32>
    %129 = arith.mulf %128, %96 : vector<8x32xf32>
    %130 = vector.broadcast %126 : vector<8x1xf32> to vector<8x32xf32>
    %131 = arith.mulf %130, %97 : vector<8x32xf32>
    %132 = arith.addf %129, %131 : vector<8x32xf32>
    %133 = vector.broadcast %127 : vector<8x1xf32> to vector<8x32xf32>
    %134 = arith.divf %132, %133 : vector<8x32xf32>
    %135 = arith.truncf %134 : vector<8x32xf32> to vector<8x32xbf16>
    %cst_40 = arith.constant dense<0.000000e+00> : vector<8x32xf32>
    %136 = tpu.matmul %135, %30, %cst_40 {dimension_numbers = #tpu.dot_dimension_numbers<[1], [0], [0], [1], [0, 0, 1, 1], [], []>} : vector<8x32xbf16>, vector<32x32xbf16>, vector<8x32xf32> -> vector<8x32xf32>
    %137 = arith.addf %43, %136 : vector<8x32xf32>
    %cst_41 = arith.constant dense<0.000000e+00> : vector<8xf32>
    %138 = vector.multi_reduction <add>, %111, %cst_41 [1] : vector<8x32xf32> to vector<8xf32>
    %139 = vector.shape_cast %138 : vector<8xf32> to vector<8x1xf32>
    %cst_42 = arith.constant 3.200000e+01 : f32
    %140 = vector.broadcast %cst_42 : f32 to vector<8x1xf32>
    %141 = arith.divf %139, %140 : vector<8x1xf32>
    %142 = vector.broadcast %141 : vector<8x1xf32> to vector<8x32xf32>
    %143 = arith.subf %111, %142 : vector<8x32xf32>
    %144 = arith.mulf %143, %143 : vector<8x32xf32>
    %cst_43 = arith.constant dense<0.000000e+00> : vector<8xf32>
    %145 = vector.multi_reduction <add>, %144, %cst_43 [1] : vector<8x32xf32> to vector<8xf32>
    %146 = vector.shape_cast %145 : vector<8xf32> to vector<8x1xf32>
    %cst_44 = arith.constant 3.200000e+01 : f32
    %147 = vector.broadcast %cst_44 : f32 to vector<8x1xf32>
    %148 = arith.divf %146, %147 : vector<8x1xf32>
    %149 = vector.broadcast %141 : vector<8x1xf32> to vector<8x32xf32>
    %150 = arith.subf %111, %149 : vector<8x32xf32>
    %cst_45 = arith.constant 9.99999974E-6 : f32
    %151 = vector.broadcast %cst_45 : f32 to vector<8x1xf32>
    %152 = arith.addf %148, %151 : vector<8x1xf32>
    %153 = math.rsqrt %152 : vector<8x1xf32>
    %154 = vector.broadcast %153 : vector<8x1xf32> to vector<8x32xf32>
    %155 = arith.mulf %150, %154 : vector<8x32xf32>
    %156 = vector.broadcast %23 : vector<1x32xf32> to vector<8x32xf32>
    %157 = arith.mulf %155, %156 : vector<8x32xf32>
    %158 = vector.broadcast %24 : vector<1x32xf32> to vector<8x32xf32>
    %159 = arith.addf %157, %158 : vector<8x32xf32>
    %160 = arith.truncf %159 : vector<8x32xf32> to vector<8x32xbf16>
    %cst_46 = arith.constant dense<0.000000e+00> : vector<8x64xf32>
    %161 = tpu.matmul %160, %31, %cst_46 {dimension_numbers = #tpu.dot_dimension_numbers<[1], [0], [0], [1], [0, 0, 1, 1], [], []>} : vector<8x32xbf16>, vector<32x64xbf16>, vector<8x64xf32> -> vector<8x64xf32>
    %162 = vector.broadcast %25 : vector<1x64xf32> to vector<8x64xf32>
    %163 = arith.addf %161, %162 : vector<8x64xf32>
    %cst_47 = arith.constant 5.000000e-01 : f32
    %164 = vector.broadcast %cst_47 : f32 to vector<8x64xf32>
    %165 = arith.mulf %164, %163 : vector<8x64xf32>
    %166 = arith.mulf %163, %163 : vector<8x64xf32>
    %167 = arith.mulf %163, %166 : vector<8x64xf32>
    %cst_48 = arith.constant 4.471500e-02 : f32
    %168 = vector.broadcast %cst_48 : f32 to vector<8x64xf32>
    %169 = arith.mulf %168, %167 : vector<8x64xf32>
    %170 = arith.addf %163, %169 : vector<8x64xf32>
    %cst_49 = arith.constant 0.797884583 : f32
    %171 = vector.broadcast %cst_49 : f32 to vector<8x64xf32>
    %172 = arith.mulf %171, %170 : vector<8x64xf32>
    %173 = math.tanh %172 : vector<8x64xf32>
    %cst_50 = arith.constant 1.000000e+00 : f32
    %174 = vector.broadcast %cst_50 : f32 to vector<8x64xf32>
    %175 = arith.addf %174, %173 : vector<8x64xf32>
    %176 = arith.mulf %165, %175 : vector<8x64xf32>
    %177 = arith.truncf %176 : vector<8x64xf32> to vector<8x64xbf16>
    %cst_51 = arith.constant dense<0.000000e+00> : vector<8x32xf32>
    %178 = tpu.matmul %177, %32, %cst_51 {dimension_numbers = #tpu.dot_dimension_numbers<[1], [0], [0], [1], [0, 0, 1, 1], [], []>} : vector<8x64xbf16>, vector<64x32xbf16>, vector<8x32xf32> -> vector<8x32xf32>
    %179 = arith.addf %111, %178 : vector<8x32xf32>
    %180 = vector.broadcast %26 : vector<1x32xf32> to vector<8x32xf32>
    %181 = arith.addf %179, %180 : vector<8x32xf32>
    %cst_52 = arith.constant dense<0.000000e+00> : vector<8xf32>
    %182 = vector.multi_reduction <add>, %137, %cst_52 [1] : vector<8x32xf32> to vector<8xf32>
    %183 = vector.shape_cast %182 : vector<8xf32> to vector<8x1xf32>
    %cst_53 = arith.constant 3.200000e+01 : f32
    %184 = vector.broadcast %cst_53 : f32 to vector<8x1xf32>
    %185 = arith.divf %183, %184 : vector<8x1xf32>
    %186 = vector.broadcast %185 : vector<8x1xf32> to vector<8x32xf32>
    %187 = arith.subf %137, %186 : vector<8x32xf32>
    %188 = arith.mulf %187, %187 : vector<8x32xf32>
    %cst_54 = arith.constant dense<0.000000e+00> : vector<8xf32>
    %189 = vector.multi_reduction <add>, %188, %cst_54 [1] : vector<8x32xf32> to vector<8xf32>
    %190 = vector.shape_cast %189 : vector<8xf32> to vector<8x1xf32>
    %cst_55 = arith.constant 3.200000e+01 : f32
    %191 = vector.broadcast %cst_55 : f32 to vector<8x1xf32>
    %192 = arith.divf %190, %191 : vector<8x1xf32>
    %193 = vector.broadcast %185 : vector<8x1xf32> to vector<8x32xf32>
    %194 = arith.subf %137, %193 : vector<8x32xf32>
    %cst_56 = arith.constant 9.99999974E-6 : f32
    %195 = vector.broadcast %cst_56 : f32 to vector<8x1xf32>
    %196 = arith.addf %192, %195 : vector<8x1xf32>
    %197 = math.rsqrt %196 : vector<8x1xf32>
    %198 = vector.broadcast %197 : vector<8x1xf32> to vector<8x32xf32>
    %199 = arith.mulf %194, %198 : vector<8x32xf32>
    %200 = vector.broadcast %23 : vector<1x32xf32> to vector<8x32xf32>
    %201 = arith.mulf %199, %200 : vector<8x32xf32>
    %202 = vector.broadcast %24 : vector<1x32xf32> to vector<8x32xf32>
    %203 = arith.addf %201, %202 : vector<8x32xf32>
    %204 = arith.truncf %203 : vector<8x32xf32> to vector<8x32xbf16>
    %cst_57 = arith.constant dense<0.000000e+00> : vector<8x64xf32>
    %205 = tpu.matmul %204, %31, %cst_57 {dimension_numbers = #tpu.dot_dimension_numbers<[1], [0], [0], [1], [0, 0, 1, 1], [], []>} : vector<8x32xbf16>, vector<32x64xbf16>, vector<8x64xf32> -> vector<8x64xf32>
    %206 = vector.broadcast %25 : vector<1x64xf32> to vector<8x64xf32>
    %207 = arith.addf %205, %206 : vector<8x64xf32>
    %cst_58 = arith.constant 5.000000e-01 : f32
    %208 = vector.broadcast %cst_58 : f32 to vector<8x64xf32>
    %209 = arith.mulf %208, %207 : vector<8x64xf32>
    %210 = arith.mulf %207, %207 : vector<8x64xf32>
    %211 = arith.mulf %207, %210 : vector<8x64xf32>
    %cst_59 = arith.constant 4.471500e-02 : f32
    %212 = vector.broadcast %cst_59 : f32 to vector<8x64xf32>
    %213 = arith.mulf %212, %211 : vector<8x64xf32>
    %214 = arith.addf %207, %213 : vector<8x64xf32>
    %cst_60 = arith.constant 0.797884583 : f32
    %215 = vector.broadcast %cst_60 : f32 to vector<8x64xf32>
    %216 = arith.mulf %215, %214 : vector<8x64xf32>
    %217 = math.tanh %216 : vector<8x64xf32>
    %cst_61 = arith.constant 1.000000e+00 : f32
    %218 = vector.broadcast %cst_61 : f32 to vector<8x64xf32>
    %219 = arith.addf %218, %217 : vector<8x64xf32>
    %220 = arith.mulf %209, %219 : vector<8x64xf32>
    %221 = arith.truncf %220 : vector<8x64xf32> to vector<8x64xbf16>
    %cst_62 = arith.constant dense<0.000000e+00> : vector<8x32xf32>
    %222 = tpu.matmul %221, %32, %cst_62 {dimension_numbers = #tpu.dot_dimension_numbers<[1], [0], [0], [1], [0, 0, 1, 1], [], []>} : vector<8x64xbf16>, vector<64x32xbf16>, vector<8x32xf32> -> vector<8x32xf32>
    %223 = arith.addf %137, %222 : vector<8x32xf32>
    %224 = vector.broadcast %26 : vector<1x32xf32> to vector<8x32xf32>
    %225 = arith.addf %223, %224 : vector<8x32xf32>
    %226 = vector.extract_strided_slice %33 {offsets = [0, 0], sizes = [32, 16], strides = [1, 1]} : vector<64x16xbf16> to vector<32x16xbf16>
    %227 = arith.truncf %181 : vector<8x32xf32> to vector<8x32xbf16>
    %cst_63 = arith.constant dense<0.000000e+00> : vector<8x16xf32>
    %228 = tpu.matmul %227, %226, %cst_63 {dimension_numbers = #tpu.dot_dimension_numbers<[1], [0], [0], [1], [0, 0, 1, 1], [], []>} : vector<8x32xbf16>, vector<32x16xbf16>, vector<8x16xf32> -> vector<8x16xf32>
    %229 = vector.broadcast %27 : vector<1x16xf32> to vector<8x16xf32>
    %230 = arith.addf %229, %228 : vector<8x16xf32>
    %231 = vector.extract_strided_slice %33 {offsets = [32, 0], sizes = [32, 16], strides = [1, 1]} : vector<64x16xbf16> to vector<32x16xbf16>
    %232 = arith.truncf %225 : vector<8x32xf32> to vector<8x32xbf16>
    %cst_64 = arith.constant dense<0.000000e+00> : vector<8x16xf32>
    %233 = tpu.matmul %232, %231, %cst_64 {dimension_numbers = #tpu.dot_dimension_numbers<[1], [0], [0], [1], [0, 0, 1, 1], [], []>} : vector<8x32xbf16>, vector<32x16xbf16>, vector<8x16xf32> -> vector<8x16xf32>
    %234 = arith.addf %230, %233 : vector<8x16xf32>
    %235 = vector.broadcast %14 : vector<8x1xf32> to vector<8x16xf32>
    %236 = arith.mulf %234, %235 : vector<8x16xf32>
    %237 = vector.broadcast %4 : vector<8x1xf32> to vector<8x16xf32>
    %238 = arith.addf %236, %237 : vector<8x16xf32>
    %c0_65 = arith.constant 0 : index
    %c0_66 = arith.constant 0 : index
    %239 = vector.load %arg9[%c0_65, %c0_66] : memref<8x16xf32, #tpu.memory_space<vmem>>, vector<8x16xf32>
    tpu.vector_store %arg9[%c0_65, %c0_66], %238 {strides = array<i32>} : memref<8x16xf32, #tpu.memory_space<vmem>>, vector<8x16xf32>,
    return
  }
  func.func @transform_0(%arg0: i32) -> (i32, i32) {
    %c0_i32 = arith.constant 0 : i32
    %c0_i32_0 = arith.constant 0 : i32
    return %arg0, %c0_i32 : i32, i32
  }
  func.func @transform_1(%arg0: i32) -> (i32, i32) {
    %c0_i32 = arith.constant 0 : i32
    %c0_i32_0 = arith.constant 0 : i32
    %c0_i32_1 = arith.constant 0 : i32
    return %c0_i32, %c0_i32_0 : i32, i32
  }
  func.func @transform_2(%arg0: i32) -> (i32, i32) {
    %c0_i32 = arith.constant 0 : i32
    %c0_i32_0 = arith.constant 0 : i32
    %c0_i32_1 = arith.constant 0 : i32
    return %c0_i32, %c0_i32_0 : i32, i32
  }
  func.func @transform_3(%arg0: i32) -> (i32, i32) {
    %c0_i32 = arith.constant 0 : i32
    %c0_i32_0 = arith.constant 0 : i32
    %c0_i32_1 = arith.constant 0 : i32
    return %c0_i32, %c0_i32_0 : i32, i32
  }
  func.func @transform_4(%arg0: i32) -> (i32, i32) {
    %c0_i32 = arith.constant 0 : i32
    %c0_i32_0 = arith.constant 0 : i32
    %c0_i32_1 = arith.constant 0 : i32
    return %c0_i32, %c0_i32_0 : i32, i32
  }
  func.func @transform_5(%arg0: i32) -> (i32, i32) {
    %c0_i32 = arith.constant 0 : i32
    %c0_i32_0 = arith.constant 0 : i32
    %c0_i32_1 = arith.constant 0 : i32
    return %c0_i32, %c0_i32_0 : i32, i32
  }
  func.func @transform_6(%arg0: i32) -> (i32, i32) {
    %c0_i32 = arith.constant 0 : i32
    %c0_i32_0 = arith.constant 0 : i32
    %c0_i32_1 = arith.constant 0 : i32
    return %c0_i32, %c0_i32_0 : i32, i32
  }
  func.func @transform_7(%arg0: i32) -> (i32, i32) {
    %c0_i32 = arith.constant 0 : i32
    %c0_i32_0 = arith.constant 0 : i32
    %c0_i32_1 = arith.constant 0 : i32
    return %c0_i32, %c0_i32_0 : i32, i32
  }
  func.func @transform_8(%arg0: i32) -> (i32, i32) {
    %c0_i32 = arith.constant 0 : i32
    %c0_i32_0 = arith.constant 0 : i32
    return %arg0, %c0_i32 : i32, i32
  }
}

</mosaic_0001>

<llo_original>
// kernel: tpu_custom_call.1
$region0: #{tpu_custom_call.1}
  #allocation0 [shape = 'u32[]', space=smem, size = 0x4, offset = 0x4, fixed_abs, tag = 'smem constant byte address 0x4 - core index']
  #allocation1 [shape = 'u32[72,128]{1,0:T(1,128)}', space=vmem, size = 0x9000, scoped, tag = 'internal scratch']
  %s0 = inlined_call_operand.vmem [shape: f32[8,32], index: 0, kind: input, shape index: {}]
  %s1 = inlined_call_operand.vmem [shape: bf16[16,32], index: 1, kind: input, shape index: {}]
  %s2 = inlined_call_operand.vmem [shape: bf16[32,96], index: 2, kind: input, shape index: {}]
  %s3 = inlined_call_operand.vmem [shape: bf16[32,32], index: 3, kind: input, shape index: {}]
  %s4 = inlined_call_operand.vmem [shape: bf16[32,64], index: 4, kind: input, shape index: {}]
  %s5 = inlined_call_operand.vmem [shape: bf16[64,32], index: 5, kind: input, shape index: {}]
  %s6 = inlined_call_operand.vmem [shape: bf16[64,16], index: 6, kind: input, shape index: {}]
  %s7 = inlined_call_operand.vmem [shape: f32[8,64], index: 7, kind: input, shape index: {}]
  %s8 = inlined_call_operand.hbm [shape: f32[8,16], index: 8, kind: output, shape index: {}]
  %s9 = sld [smem:[#allocation0]]
  $region42: #{tpu_custom_call.1} parent=0
    _
  %s11 = ssub.s32 1, %s9
  %s12 = scalar_select 0, %s11, %s9
  $region1: #{tpu_custom_call.1} parent=0
    #allocation2 [shape = 'u8[4096]{0}', space=vmem, size = 0x1000, scoped, tag = 'output window, operand 0, single buffered']
    #allocation3 [shape = 's32[1]{0}', space=sflag, size = 0x4, scoped, tag = 'scoped memory for tpu_custom_call.1']
    %13 = vsyncpa [#allocation3], 0
    // Predicated region
    $region2: #{tpu_custom_call.1} parent=1 // pred_check
      _
    $region3: #{tpu_custom_call.1} parent=1 // pred_check_branch
      %15 = sbr.rel (0) target = $region5
    $region4: #{tpu_custom_call.1} parent=1 // pred_region
      _
    $region5: #{tpu_custom_call.1} parent=1 // pred_fallthru
      _
    // Predicated region
    $region6: #{tpu_custom_call.1} parent=1 // pred_check
      _
    $region7: #{tpu_custom_call.1} parent=1 // pred_check_branch
      %17 = sbr.rel (0) target = $region9
    $region8: #{tpu_custom_call.1} parent=1 // pred_region
      _
    $region9: #{tpu_custom_call.1} parent=1 // pred_fallthru
      _
    // Predicated region
    $region10: #{tpu_custom_call.1} parent=1 // pred_check
      _
    $region11: #{tpu_custom_call.1} parent=1 // pred_check_branch
      %19 = sbr.rel (0) target = $region13
    $region12: #{tpu_custom_call.1} parent=1 // pred_region
      _
    $region13: #{tpu_custom_call.1} parent=1 // pred_fallthru
      _
    // Predicated region
    $region14: #{tpu_custom_call.1} parent=1 // pred_check
      _
    $region15: #{tpu_custom_call.1} parent=1 // pred_check_branch
      %21 = sbr.rel (0) target = $region17
    $region16: #{tpu_custom_call.1} parent=1 // pred_region
      _
    $region17: #{tpu_custom_call.1} parent=1 // pred_fallthru
      _
    // Predicated region
    $region18: #{tpu_custom_call.1} parent=1 // pred_check
      _
    $region19: #{tpu_custom_call.1} parent=1 // pred_check_branch
      %23 = sbr.rel (0) target = $region21
    $region20: #{tpu_custom_call.1} parent=1 // pred_region
      _
    $region21: #{tpu_custom_call.1} parent=1 // pred_fallthru
      _
    // Predicated region
    $region22: #{tpu_custom_call.1} parent=1 // pred_check
      _
    $region23: #{tpu_custom_call.1} parent=1 // pred_check_branch
      %25 = sbr.rel (0) target = $region25
    $region24: #{tpu_custom_call.1} parent=1 // pred_region
      _
    $region25: #{tpu_custom_call.1} parent=1 // pred_fallthru
      _
    // Predicated region
    $region26: #{tpu_custom_call.1} parent=1 // pred_check
      _
    $region27: #{tpu_custom_call.1} parent=1 // pred_check_branch
      %27 = sbr.rel (0) target = $region29
    $region28: #{tpu_custom_call.1} parent=1 // pred_region
      _
    $region29: #{tpu_custom_call.1} parent=1 // pred_fallthru
      _
    // Predicated region
    $region30: #{tpu_custom_call.1} parent=1 // pred_check
      _
    $region31: #{tpu_custom_call.1} parent=1 // pred_check_branch
      %29 = sbr.rel (0) target = $region33
    $region32: #{tpu_custom_call.1} parent=1 // pred_region
      _
    $region33: #{tpu_custom_call.1} parent=1 // pred_fallthru
      _
    %v31 = vld [vmem:[%s0] sm:$0xff]
    %vm32 = vcmask 261120
    %v33 = vsel %vm32, %v31, 0.0
    %34 = vadd.xlane.f32.xlu0 %v33
    %v35 = vpop.xlane.xlu0 %34
    %v36 = vrcp.pop 32.0
    %v37 = vmul.f32 32.0, %v36
    %v38 = vsub.f32 1.0, %v37
    %v39 = vmul.f32 %v36, %v38
    %v40 = vadd.f32 %v36, %v39
    %vm41 = vweird.f32 %v36
    %v42 = vsel %vm41, %v36, %v40
    %v43 = vmul.f32 %v35, %v42
    %v44 = vsub.f32 %v31, %v43
    %v45 = vmul.f32 %v44, %v44
    %v46 = vsel %vm32, %v45, 0.0
    %47 = vadd.xlane.f32.xlu0 %v46
    %v48 = vpop.xlane.xlu0 %47
    %v49 = vmul.f32 %v48, %v42
    %v50 = vadd.f32 %v49, 1e-05
    %v51 = vrsqrt.pop %v50
    %v52 = vmul.f32 %v51, %v50
    %v53 = vmul.f32 %v52, %v51
    %v54 = vmul.f32 0.5, %v53
    %v55 = vsub.f32 1.5, %v54
    %v56 = vmul.f32 %v51, %v55
    %v57 = vmul.f32 %v50, %v56
    %vm58 = vcmp.eq.f32.partialorder %v50, inf
    %v59 = vsel %vm58, %v50, %v57
    %vm60 = vcmp.eq.f32.partialorder %v50, 0.0
    %v61 = vand.u32 %v50, 2147483648
    %v62 = vsel %vm60, %v61, %v59
    %v63 = vrcp.pop %v62
    %v64 = vmul.f32 %v62, %v63
    %v65 = vsub.f32 1.0, %v64
    %v66 = vmul.f32 %v63, %v65
    %v67 = vadd.f32 %v63, %v66
    %vm68 = vweird.f32 %v62
    %vm69 = vweird.f32 %v63
    %vm70 = vmor %vm68, %vm69
    %v71 = vsel %vm70, %v63, %v67
    %v72 = vand.u32 2147483647, %v62
    %vm73 = vcmp.eq.f32.partialorder %v72, 8.507059e+37
    %v74 = vand.u32 %v62, 2147483648
    %v75 = vor.u32 1.1754944e-38, %v74
    %v76 = vsel %vm73, %v75, %v71
    %v77 = vmul.f32 %v44, %v76
    %v78 = vld [vmem:[%s7] sm:$0xff]
    %v79 = vld [vmem:[%s1] sm:$0xf]
    %v80 = vld [vmem:[%s1 + $0x4] sm:$0xf]
    %v81 = vld [vmem:[%s2] sm:$0xf]
    %v82 = vld [vmem:[%s2 + $0x4] sm:$0xf]
    %v83 = vld [vmem:[%s2 + $0x8] sm:$0xf]
    %v84 = vld [vmem:[%s2 + $0xc] sm:$0xf]
    %v85 = vld [vmem:[%s3] sm:$0xf]
    %v86 = vld [vmem:[%s3 + $0x4] sm:$0xf]
    %v87 = vld [vmem:[%s3 + $0x8] sm:$0xf]
    %v88 = vld [vmem:[%s3 + $0xc] sm:$0xf]
    %v89 = vld [vmem:[%s4] sm:$0xf]
    %v90 = vld [vmem:[%s4 + $0x4] sm:$0xf]
    %v91 = vld [vmem:[%s4 + $0x8] sm:$0xf]
    %v92 = vld [vmem:[%s4 + $0xc] sm:$0xf]
    %v93 = vld [vmem:[%s5] sm:$0xf]
    %v94 = vld [vmem:[%s5 + $0x4] sm:$0xf]
    %v95 = vld [vmem:[%s5 + $0x8] sm:$0xf]
    %v96 = vld [vmem:[%s5 + $0xc] sm:$0xf]
    %v97 = vld [vmem:[%s5 + $0x10] sm:$0xf]
    %v98 = vld [vmem:[%s5 + $0x14] sm:$0xf]
    %v99 = vld [vmem:[%s5 + $0x18] sm:$0xf]
    %v100 = vld [vmem:[%s5 + $0x1c] sm:$0xf]
    %v101 = vld [vmem:[%s6] sm:$0xf]
    %v102 = vld [vmem:[%s6 + $0x4] sm:$0xf]
    %v103 = vld [vmem:[%s6 + $0x8] sm:$0xf]
    %v104 = vld [vmem:[%s6 + $0xc] sm:$0xf]
    %v105 = vld [vmem:[%s6 + $0x10] sm:$0xf]
    %v106 = vld [vmem:[%s6 + $0x14] sm:$0xf]
    %v107 = vld [vmem:[%s6 + $0x18] sm:$0xf]
    %v108 = vld [vmem:[%s6 + $0x1c] sm:$0xf]
    %v109 = vpack.c.bf16 %v77, %v77
    %v110 = vperm.slane %v78, 0
    %v113 = vunpack.c.l.b16 %v79
    %v114 = vunpack.c.l.b16 %v80
    %v115 = vpack.c.b16 %v114, %v113
    %vm117 = vcmask 130048
    %v119 = vsel %vm117, %v109, 0
    %121 = vmatpush.bf16.msra.mxu0 0
    %122 = vmatpush.bf16.msra.mxu0 0
    %123 = vmatpush.bf16.msra.mxu0 0
    %124 = vmatpush.bf16.msra.mxu0 0
    %125 = vmatpush.bf16.msra.mxu0 0
    %126 = vmatpush.bf16.msra.mxu0 0
    %127 = vmatpush.bf16.msra.mxu0 0
    %128 = vmatpush.bf16.msra.mxu0 %v115
    %129 = vmatmul.bf16.gmra.mxu0 %v119
    %v130 = vpop.f32.mrf.mxu0
    %v131 = vadd.f32 %v110, %v130
    %v132 = vpop.f32.mrf.mxu0
    %133 = vdwg.mxu0
    %135 = vrot.lane.b32.xlu0 %v109, 112
    %v136 = vpop.permute.xlu0 %135
    %v138 = vsel %vm117, %v136, 0
    %140 = vmatpush.bf16.msra.mxu0 0
    %141 = vmatpush.bf16.msra.mxu0 0
    %142 = vmatpush.bf16.msra.mxu0 0
    %143 = vmatpush.bf16.msra.mxu0 0
    %144 = vmatpush.bf16.msra.mxu0 0
    %145 = vmatpush.bf16.msra.mxu0 0
    %146 = vmatpush.bf16.msra.mxu0 0
    %147 = vmatpush.bf16.msra.mxu0 %v115
    %148 = vmatmul.bf16.gmra.mxu0 %v138
    %v149 = vpop.f32.mrf.mxu0
    %v150 = vadd.f32 %v110, %v149
    %v151 = vpop.f32.mrf.mxu0
    %152 = vdwg.mxu0
    %v153 = vsel %vm32, %v131, 0.0
    %154 = vadd.xlane.f32.xlu0 %v153
    %v155 = vpop.xlane.xlu0 %154
    %v156 = vmul.f32 %v155, %v42
    %v157 = vsub.f32 %v131, %v156
    %v158 = vmul.f32 %v157, %v157
    %v159 = vsel %vm32, %v158, 0.0
    %160 = vadd.xlane.f32.xlu0 %v159
    %v161 = vpop.xlane.xlu0 %160
    %v162 = vmul.f32 %v161, %v42
    %v163 = vadd.f32 %v162, 1e-05
    %v164 = vrsqrt.pop %v163
    %v165 = vmul.f32 %v164, %v163
    %v166 = vmul.f32 %v165, %v164
    %v167 = vmul.f32 0.5, %v166
    %v168 = vsub.f32 1.5, %v167
    %v169 = vmul.f32 %v164, %v168
    %vm170 = vweird.f32 %v163
    %vm171 = vweird.f32 %v164
    %vm172 = vmor %vm170, %vm171
    %v173 = vsel %vm172, %v164, %v169
    %v174 = vmul.f32 %v157, %v173
    %v175 = vperm.slane %v78, 1
    %v176 = vmul.f32 %v174, %v175
    %v177 = vperm.slane %v78, 2
    %v178 = vadd.f32 %v176, %v177
    %v179 = vpack.c.bf16 %v178, %v178
    %v184 = vunpack.c.l.b16 %v81
    %v185 = vunpack.c.l.b16 %v82
    %v186 = vunpack.c.l.b16 %v83
    %v187 = vunpack.c.l.b16 %v84
    %v188 = vpack.c.b16 %v185, %v184
    %v189 = vpack.c.b16 %v187, %v186
    %v193 = vsel %vm32, %v179, 0
    %195 = vmatpush.bf16.msra.mxu0 0
    %196 = vmatpush.bf16.msra.mxu0 0
    %197 = vmatpush.bf16.msra.mxu0 0
    %198 = vmatpush.bf16.msra.mxu0 0
    %199 = vmatpush.bf16.msra.mxu0 0
    %200 = vmatpush.bf16.msra.mxu0 0
    %201 = vmatpush.bf16.msra.mxu0 %v189
    %202 = vmatpush.bf16.msra.mxu0 %v188
    %203 = vmatmul.bf16.gmra.mxu0 %v193
    %v204 = vpop.f32.mrf.mxu0
    %v205 = vadd.f32 0.0, %v204
    %v206 = vpop.f32.mrf.mxu0
    %207 = vdwg.mxu0
    %v208 = vsel %vm32, %v150, 0.0
    %209 = vadd.xlane.f32.xlu0 %v208
    %v210 = vpop.xlane.xlu0 %209
    %v211 = vmul.f32 %v210, %v42
    %v212 = vsub.f32 %v150, %v211
    %v213 = vmul.f32 %v212, %v212
    %v214 = vsel %vm32, %v213, 0.0
    %215 = vadd.xlane.f32.xlu0 %v214
    %v216 = vpop.xlane.xlu0 %215
    %v217 = vmul.f32 %v216, %v42
    %v218 = vadd.f32 %v217, 1e-05
    %v219 = vrsqrt.pop %v218
    %v220 = vmul.f32 %v219, %v218
    %v221 = vmul.f32 %v220, %v219
    %v222 = vmul.f32 0.5, %v221
    %v223 = vsub.f32 1.5, %v222
    %v224 = vmul.f32 %v219, %v223
    %vm225 = vweird.f32 %v218
    %vm226 = vweird.f32 %v219
    %vm227 = vmor %vm225, %vm226
    %v228 = vsel %vm227, %v219, %v224
    %v229 = vmul.f32 %v212, %v228
    %v230 = vmul.f32 %v229, %v175
    %v231 = vadd.f32 %v230, %v177
    %v232 = vpack.c.bf16 %v231, %v231
    %v234 = vsel %vm32, %v232, 0
    %236 = vmatpush.bf16.msra.mxu0 0
    %237 = vmatpush.bf16.msra.mxu0 0
    %238 = vmatpush.bf16.msra.mxu0 0
    %239 = vmatpush.bf16.msra.mxu0 0
    %240 = vmatpush.bf16.msra.mxu0 0
    %241 = vmatpush.bf16.msra.mxu0 0
    %242 = vmatpush.bf16.msra.mxu0 %v189
    %243 = vmatpush.bf16.msra.mxu0 %v188
    %244 = vmatmul.bf16.gmra.mxu0 %v234
    %v245 = vpop.f32.mrf.mxu0
    %v246 = vadd.f32 0.0, %v245
    %v247 = vpop.f32.mrf.mxu0
    %248 = vdwg.mxu0
    %250 = vrot.lane.b32.xlu0 %v205, 96
    %v251 = vpop.permute.xlu0 %250
    %v253 = vmul.f32 %v205, %v251
    %v254 = vsel %vm32, %v253, 0.0
    %255 = vadd.xlane.f32.xlu0 %v254
    %v256 = vpop.xlane.xlu0 %255
    %v257 = vmul.f32 %v256, 0.17677669
    %v258 = vsub.f32 %v257, %v257
    %v259 = vmul.f32 %v258, 1.442695
    %v260 = vpow.pop %v259
    %v261 = vmul.f32 %v260, %v205
    %v262 = vrcp.pop %v260
    %v263 = vmul.f32 %v260, %v262
    %v264 = vsub.f32 1.0, %v263
    %v265 = vmul.f32 %v262, %v264
    %v266 = vadd.f32 %v262, %v265
    %vm267 = vweird.f32 %v260
    %vm268 = vweird.f32 %v262
    %vm269 = vmor %vm267, %vm268
    %v270 = vsel %vm269, %v262, %v266
    %v271 = vand.u32 2147483647, %v260
    %vm272 = vcmp.eq.f32.partialorder %v271, 8.507059e+37
    %v273 = vand.u32 %v260, 2147483648
    %v274 = vor.u32 1.1754944e-38, %v273
    %v275 = vsel %vm272, %v274, %v270
    %v276 = vmul.f32 %v261, %v275
    %v277 = vpack.c.bf16 %v276, %v276
    %279 = vrot.lane.b32.xlu0 %v277, 64
    %v280 = vpop.permute.xlu0 %279
    %v285 = vunpack.c.l.b16 %v85
    %v286 = vunpack.c.l.b16 %v86
    %v287 = vunpack.c.l.b16 %v87
    %v288 = vunpack.c.l.b16 %v88
    %v289 = vpack.c.b16 %v286, %v285
    %v290 = vpack.c.b16 %v288, %v287
    %v294 = vsel %vm32, %v280, 0
    %296 = vmatpush.bf16.msra.mxu0 0
    %297 = vmatpush.bf16.msra.mxu0 0
    %298 = vmatpush.bf16.msra.mxu0 0
    %299 = vmatpush.bf16.msra.mxu0 0
    %300 = vmatpush.bf16.msra.mxu0 0
    %301 = vmatpush.bf16.msra.mxu0 0
    %302 = vmatpush.bf16.msra.mxu0 %v290
    %303 = vmatpush.bf16.msra.mxu0 %v289
    %304 = vmatmul.bf16.gmra.mxu0 %v294
    %v305 = vpop.f32.mrf.mxu0
    %v306 = vadd.f32 0.0, %v305
    %v307 = vpop.f32.mrf.mxu0
    %308 = vdwg.mxu0
    %v309 = vadd.f32 %v131, %v306
    %v310 = vmul.f32 %v246, %v251
    %v311 = vsel %vm32, %v310, 0.0
    %312 = vadd.xlane.f32.xlu0 %v311
    %v313 = vpop.xlane.xlu0 %312
    %v314 = vmul.f32 %v313, 0.17677669
    %316 = vrot.lane.b32.xlu0 %v246, 96
    %v317 = vpop.permute.xlu0 %316
    %v319 = vmul.f32 %v246, %v317
    %v320 = vsel %vm32, %v319, 0.0
    %321 = vadd.xlane.f32.xlu0 %v320
    %v322 = vpop.xlane.xlu0 %321
    %v323 = vmul.f32 %v322, 0.17677669
    %v324 = vmax.f32 %v314, %v323
    %v325 = vsub.f32 %v314, %v324
    %v326 = vmul.f32 %v325, 1.442695
    %v327 = vpow.pop %v326
    %v328 = vsub.f32 %v323, %v324
    %v329 = vmul.f32 %v328, 1.442695
    %v330 = vpow.pop %v329
    %v331 = vadd.f32 %v327, %v330
    %v332 = vmul.f32 %v327, %v205
    %v333 = vmul.f32 %v330, %v246
    %v334 = vadd.f32 %v332, %v333
    %v335 = vrcp.pop %v331
    %v336 = vmul.f32 %v331, %v335
    %v337 = vsub.f32 1.0, %v336
    %v338 = vmul.f32 %v335, %v337
    %v339 = vadd.f32 %v335, %v338
    %vm340 = vweird.f32 %v331
    %vm341 = vweird.f32 %v335
    %vm342 = vmor %vm340, %vm341
    %v343 = vsel %vm342, %v335, %v339
    %v344 = vand.u32 2147483647, %v331
    %vm345 = vcmp.eq.f32.partialorder %v344, 8.507059e+37
    %v346 = vand.u32 %v331, 2147483648
    %v347 = vor.u32 1.1754944e-38, %v346
    %v348 = vsel %vm345, %v347, %v343
    %v349 = vmul.f32 %v334, %v348
    %v350 = vpack.c.bf16 %v349, %v349
    %352 = vrot.lane.b32.xlu0 %v350, 64
    %v353 = vpop.permute.xlu0 %352
    %v355 = vsel %vm32, %v353, 0
    %357 = vmatpush.bf16.msra.mxu0 0
    %358 = vmatpush.bf16.msra.mxu0 0
    %359 = vmatpush.bf16.msra.mxu0 0
    %360 = vmatpush.bf16.msra.mxu0 0
    %361 = vmatpush.bf16.msra.mxu0 0
    %362 = vmatpush.bf16.msra.mxu0 0
    %363 = vmatpush.bf16.msra.mxu0 %v290
    %364 = vmatpush.bf16.msra.mxu0 %v289
    %365 = vmatmul.bf16.gmra.mxu0 %v355
    %v366 = vpop.f32.mrf.mxu0
    %v367 = vadd.f32 0.0, %v366
    %v368 = vpop.f32.mrf.mxu0
    %369 = vdwg.mxu0
    %v370 = vadd.f32 %v150, %v367
    %v371 = vsel %vm32, %v309, 0.0
    %372 = vadd.xlane.f32.xlu0 %v371
    %v373 = vpop.xlane.xlu0 %372
    %v374 = vmul.f32 %v373, %v42
    %v375 = vsub.f32 %v309, %v374
    %v376 = vmul.f32 %v375, %v375
    %v377 = vsel %vm32, %v376, 0.0
    %378 = vadd.xlane.f32.xlu0 %v377
    %v379 = vpop.xlane.xlu0 %378
    %v380 = vmul.f32 %v379, %v42
    %v381 = vadd.f32 %v380, 1e-05
    %v382 = vrsqrt.pop %v381
    %v383 = vmul.f32 %v382, %v381
    %v384 = vmul.f32 %v383, %v382
    %v385 = vmul.f32 0.5, %v384
    %v386 = vsub.f32 1.5, %v385
    %v387 = vmul.f32 %v382, %v386
    %vm388 = vweird.f32 %v381
    %vm389 = vweird.f32 %v382
    %vm390 = vmor %vm388, %vm389
    %v391 = vsel %vm390, %v382, %v387
    %v392 = vmul.f32 %v375, %v391
    %v393 = vperm.slane %v78, 3
    %v394 = vmul.f32 %v392, %v393
    %v395 = vperm.slane %v78, 4
    %v396 = vadd.f32 %v394, %v395
    %v397 = vpack.c.bf16 %v396, %v396
    %v398 = vperm.slane %v78, 5
    %v403 = vunpack.c.l.b16 %v89
    %v404 = vunpack.c.l.b16 %v90
    %v405 = vunpack.c.l.b16 %v91
    %v406 = vunpack.c.l.b16 %v92
    %v407 = vpack.c.b16 %v404, %v403
    %v408 = vpack.c.b16 %v406, %v405
    %v412 = vsel %vm32, %v397, 0
    %414 = vmatpush.bf16.msra.mxu0 0
    %415 = vmatpush.bf16.msra.mxu0 0
    %416 = vmatpush.bf16.msra.mxu0 0
    %417 = vmatpush.bf16.msra.mxu0 0
    %418 = vmatpush.bf16.msra.mxu0 0
    %419 = vmatpush.bf16.msra.mxu0 0
    %420 = vmatpush.bf16.msra.mxu0 %v408
    %421 = vmatpush.bf16.msra.mxu0 %v407
    %422 = vmatmul.bf16.gmra.mxu0 %v412
    %v423 = vpop.f32.mrf.mxu0
    %v424 = vadd.f32 %v398, %v423
    %v425 = vpop.f32.mrf.mxu0
    %426 = vdwg.mxu0
    %v427 = vmul.f32 %v424, 0.5
    %v428 = vmul.f32 %v424, %v424
    %v429 = vmul.f32 %v424, %v428
    %v430 = vmul.f32 %v429, 0.044715
    %v431 = vadd.f32 %v424, %v430
    %v432 = vmul.f32 %v431, 0.7978846
    %v433 = vtanh.pop %v432
    %v434 = vadd.f32 %v433, 1.0
    %v435 = vmul.f32 %v427, %v434
    %v436 = vpack.c.bf16 %v435, %v435
    %v445 = vunpack.c.l.b16 %v93
    %v446 = vunpack.c.l.b16 %v94
    %v447 = vunpack.c.l.b16 %v95
    %v448 = vunpack.c.l.b16 %v96
    %v449 = vunpack.c.l.b16 %v97
    %v450 = vunpack.c.l.b16 %v98
    %v451 = vunpack.c.l.b16 %v99
    %v452 = vunpack.c.l.b16 %v100
    %v453 = vpack.c.b16 %v446, %v445
    %v454 = vpack.c.b16 %v448, %v447
    %v455 = vpack.c.b16 %v450, %v449
    %v456 = vpack.c.b16 %v452, %v451
    %vm461 = vcmask 523264
    %v463 = vsel %vm461, %v436, 0
    %465 = vmatpush.bf16.msra.mxu0 0
    %466 = vmatpush.bf16.msra.mxu0 0
    %467 = vmatpush.bf16.msra.mxu0 0
    %468 = vmatpush.bf16.msra.mxu0 0
    %469 = vmatpush.bf16.msra.mxu0 %v456
    %470 = vmatpush.bf16.msra.mxu0 %v455
    %471 = vmatpush.bf16.msra.mxu0 %v454
    %472 = vmatpush.bf16.msra.mxu0 %v453
    %473 = vmatmul.bf16.gmra.mxu0 %v463
    %v474 = vpop.f32.mrf.mxu0
    %v475 = vadd.f32 0.0, %v474
    %v476 = vpop.f32.mrf.mxu0
    %477 = vdwg.mxu0
    %v478 = vadd.f32 %v309, %v475
    %v479 = vperm.slane %v78, 6
    %v480 = vadd.f32 %v478, %v479
    %v481 = vsel %vm32, %v370, 0.0
    %482 = vadd.xlane.f32.xlu0 %v481
    %v483 = vpop.xlane.xlu0 %482
    %v484 = vmul.f32 %v483, %v42
    %v485 = vsub.f32 %v370, %v484
    %v486 = vmul.f32 %v485, %v485
    %v487 = vsel %vm32, %v486, 0.0
    %488 = vadd.xlane.f32.xlu0 %v487
    %v489 = vpop.xlane.xlu0 %488
    %v490 = vmul.f32 %v489, %v42
    %v491 = vadd.f32 %v490, 1e-05
    %v492 = vrsqrt.pop %v491
    %v493 = vmul.f32 %v492, %v491
    %v494 = vmul.f32 %v493, %v492
    %v495 = vmul.f32 0.5, %v494
    %v496 = vsub.f32 1.5, %v495
    %v497 = vmul.f32 %v492, %v496
    %vm498 = vweird.f32 %v491
    %vm499 = vweird.f32 %v492
    %vm500 = vmor %vm498, %vm499
    %v501 = vsel %vm500, %v492, %v497
    %v502 = vmul.f32 %v485, %v501
    %v503 = vmul.f32 %v502, %v393
    %v504 = vadd.f32 %v503, %v395
    %v505 = vpack.c.bf16 %v504, %v504
    %v507 = vsel %vm32, %v505, 0
    %509 = vmatpush.bf16.msra.mxu0 0
    %510 = vmatpush.bf16.msra.mxu0 0
    %511 = vmatpush.bf16.msra.mxu0 0
    %512 = vmatpush.bf16.msra.mxu0 0
    %513 = vmatpush.bf16.msra.mxu0 0
    %514 = vmatpush.bf16.msra.mxu0 0
    %515 = vmatpush.bf16.msra.mxu0 %v408
    %516 = vmatpush.bf16.msra.mxu0 %v407
    %517 = vmatmul.bf16.gmra.mxu0 %v507
    %v518 = vpop.f32.mrf.mxu0
    %v519 = vadd.f32 %v398, %v518
    %v520 = vpop.f32.mrf.mxu0
    %521 = vdwg.mxu0
    %v522 = vmul.f32 %v519, 0.5
    %v523 = vmul.f32 %v519, %v519
    %v524 = vmul.f32 %v519, %v523
    %v525 = vmul.f32 %v524, 0.044715
    %v526 = vadd.f32 %v519, %v525
    %v527 = vmul.f32 %v526, 0.7978846
    %v528 = vtanh.pop %v527
    %v529 = vadd.f32 %v528, 1.0
    %v530 = vmul.f32 %v522, %v529
    %v531 = vpack.c.bf16 %v530, %v530
    %v533 = vsel %vm461, %v531, 0
    %535 = vmatpush.bf16.msra.mxu0 0
    %536 = vmatpush.bf16.msra.mxu0 0
    %537 = vmatpush.bf16.msra.mxu0 0
    %538 = vmatpush.bf16.msra.mxu0 0
    %539 = vmatpush.bf16.msra.mxu0 %v456
    %540 = vmatpush.bf16.msra.mxu0 %v455
    %541 = vmatpush.bf16.msra.mxu0 %v454
    %542 = vmatpush.bf16.msra.mxu0 %v453
    %543 = vmatmul.bf16.gmra.mxu0 %v533
    %v544 = vpop.f32.mrf.mxu0
    %v545 = vadd.f32 0.0, %v544
    %v546 = vpop.f32.mrf.mxu0
    %547 = vdwg.mxu0
    %v548 = vadd.f32 %v370, %v545
    %v549 = vadd.f32 %v548, %v479
    %v550 = vpack.c.bf16 %v480, %v480
    %v555 = vunpack.c.l.b16 %v101
    %v556 = vunpack.c.l.b16 %v102
    %v557 = vunpack.c.l.b16 %v103
    %v558 = vunpack.c.l.b16 %v104
    %v559 = vpack.c.b16 %v556, %v555
    %v560 = vpack.c.b16 %v558, %v557
    %v564 = vsel %vm32, %v550, 0
    %566 = vmatpush.bf16.msra.mxu0 0
    %567 = vmatpush.bf16.msra.mxu0 0
    %568 = vmatpush.bf16.msra.mxu0 0
    %569 = vmatpush.bf16.msra.mxu0 0
    %570 = vmatpush.bf16.msra.mxu0 0
    %571 = vmatpush.bf16.msra.mxu0 0
    %572 = vmatpush.bf16.msra.mxu0 %v560
    %573 = vmatpush.bf16.msra.mxu0 %v559
    %574 = vmatmul.bf16.gmra.mxu0 %v564
    %v575 = vpop.f32.mrf.mxu0
    %v576 = vadd.f32 0.0, %v575
    %v577 = vpop.f32.mrf.mxu0
    %578 = vdwg.mxu0
    %v579 = vperm.slane %v78, 7
    %v580 = vadd.f32 %v579, %v576
    %v581 = vpack.c.bf16 %v549, %v549
    %v586 = vunpack.c.l.b16 %v105
    %v587 = vunpack.c.l.b16 %v106
    %v588 = vunpack.c.l.b16 %v107
    %v589 = vunpack.c.l.b16 %v108
    %v590 = vpack.c.b16 %v587, %v586
    %v591 = vpack.c.b16 %v589, %v588
    %v595 = vsel %vm32, %v581, 0
    %597 = vmatpush.bf16.msra.mxu0 0
    %598 = vmatpush.bf16.msra.mxu0 0
    %599 = vmatpush.bf16.msra.mxu0 0
    %600 = vmatpush.bf16.msra.mxu0 0
    %601 = vmatpush.bf16.msra.mxu0 0
    %602 = vmatpush.bf16.msra.mxu0 0
    %603 = vmatpush.bf16.msra.mxu0 %v591
    %604 = vmatpush.bf16.msra.mxu0 %v590
    %605 = vmatmul.bf16.gmra.mxu0 %v595
    %v606 = vpop.f32.mrf.mxu0
    %v607 = vadd.f32 0.0, %v606
    %v608 = vpop.f32.mrf.mxu0
    %609 = vdwg.mxu0
    %v610 = vadd.f32 %v580, %v607
    %v611 = vmul.f32 %v610, %v62
    %v612 = vadd.f32 %v611, %v43
    %613 = vst.msk [vmem:[#allocation2] sm:$0xff] %vm117, %v612
    // Predicated region
    $region34: #{tpu_custom_call.1} parent=1 // pred_check
      _
    $region35: #{tpu_custom_call.1} parent=1 // pred_check_branch
      %615 = sbr.rel (0) target = $region37
    $region36: #{tpu_custom_call.1} parent=1 // pred_region
      %617 = vsyncadd [#allocation3], 0
      %s619 = sshll.u32 [#allocation2], 4
      %s620 = int_to_ptr.vmem [resolvable:$true] %s619
      %s621 = sshll.u32 %s8, 4
      %s622 = int_to_ptr.hbm [resolvable:$true] %s621
      %624 = dma.vmem_to_hbm [thread:$0]  %s620, 128, %s622, [#allocation3]
    $region37: #{tpu_custom_call.1} parent=1 // pred_fallthru
      _
    // Predicated region
    $region38: #{tpu_custom_call.1} parent=1 // pred_check
      _
    $region39: #{tpu_custom_call.1} parent=1 // pred_check_branch
      %626 = sbr.rel (0) target = $region41
    $region40: #{tpu_custom_call.1} parent=1 // pred_region
      %628 = dma.done [#allocation3], 128
    $region41: #{tpu_custom_call.1} parent=1 // pred_fallthru
      _
    %629 = vsyncpa [#allocation3], 1

</llo_original>
